<compile_context>
chip_gen: v6e
topology: v6e:2x2x1
jax: 0.10.0
libtpu: 0.0.40
codegen_flags: <defaults>
</compile_context>

<pallas_src>
import functools

import jax
import jax.numpy as jnp
from jax.experimental import pallas as pl
from jax.experimental.pallas import tpu as pltpu

_LANE = 1024    # lane-dense slab width (large multiple of 128)
_MAX_TM = 512   # sublane tile: (512, 1024) f32 = 2 MiB per block


def _round_up(x, m):
    return (x + m - 1) // m * m


def _pact_relu_kernel(ub_ref, x_ref, o_ref, *, scale, inv_scale):
    # ub_ref: (1,) scalar in SMEM (the learnable upper_bound parameter)
    ub = ub_ref[0]
    inv_ub = 1.0 / ub              # one runtime divide per grid step
    q = scale * inv_ub             # == scale / ub
    dq = ub * inv_scale            # == ub / scale  (inv_scale is static)
    x = x_ref[...]
    y = jnp.clip(x, 0.0, ub)
    # fake-quantize: round to the a_bit grid, then dequantize
    # (jnp.round matches torch.round: round-half-to-even)
    o_ref[...] = jnp.round(y * q) * dq


def pact_relu(x_nchw, upper_bound, a_bit=4):
    """x_nchw: float array in NCHW layout. upper_bound: scalar parameter."""
    scale = float(2 ** a_bit - 1)
    n, c, h, w = x_nchw.shape
    total = n * c * h * w

    # Flatten to a lane-dense 2D slab (rows, _LANE); zero-pad if needed.
    rows_raw = pl.cdiv(total, _LANE)
    tm = min(_MAX_TM, _round_up(rows_raw, 8))   # small inputs -> one small tile
    rows = _round_up(rows_raw, tm)              # grid divides evenly
    pad = rows * _LANE - total

    flat = x_nchw.reshape(-1)
    if pad:
        flat = jnp.pad(flat, (0, pad))          # zeros are numerically inert here
    x2d = flat.reshape(rows, _LANE)

    ub = jnp.asarray(upper_bound, jnp.float32).reshape(1)

    kernel = functools.partial(_pact_relu_kernel, scale=scale,
                               inv_scale=1.0 / scale)
    out2d = pl.pallas_call(
        kernel,
        out_shape=jax.ShapeDtypeStruct(x2d.shape, x2d.dtype),
        grid=(rows // tm,),
        in_specs=[
            pl.BlockSpec(memory_space=pltpu.SMEM),          # upper_bound scalar
            pl.BlockSpec((tm, _LANE), lambda i: (i, 0)),    # activation tile
        ],
        out_specs=pl.BlockSpec((tm, _LANE), lambda i: (i, 0)),
        compiler_params=pltpu.CompilerParams(
            dimension_semantics=("parallel",),              # 2 TCs on v7x
        ),
    )(ub, x2d)

    out_flat = out2d.reshape(-1)
    if pad:
        out_flat = out_flat[:total]
    return out_flat.reshape(n, c, h, w)


def pact_relu_ref(x, upper_bound, a_bit=4):
    scale = float(2 ** a_bit - 1)
    y = jnp.clip(x, 0.0, upper_bound)
    y = jnp.round(y * (scale / upper_bound))
    return y * (upper_bound / scale)


if __name__ == "__main__":
    key = jax.random.PRNGKey(0)
    # small conv-style activation, NCHW
    x = jax.random.normal(key, (2, 4, 16, 16), dtype=jnp.float32) * 6.0

    # deterministic parameter init, matching nn.Parameter(torch.tensor(10.0))
    upper_bound = 10.0
    a_bit = 4

    out = pact_relu(x, upper_bound, a_bit)
    out = jax.block_until_ready(out)

    ref = pact_relu_ref(x, upper_bound, a_bit)
    assert out.shape == x.shape and out.dtype == x.dtype
    assert jnp.allclose(out, ref, atol=1e-5), "mismatch vs reference"

    print("KERNEL_OK")
</pallas_src>

<mosaic_0001>
module attributes {stable_mosaic.version = 11 : i64} {
  func.func @_pact_relu_kernel(%arg0: i32, %arg1: memref<1xf32, #tpu.memory_space<smem>>, %arg2: memref<8x1024xf32, #tpu.memory_space<vmem>>, %arg3: memref<8x1024xf32, #tpu.memory_space<vmem>>) attributes {dimension_semantics = [#tpu.dimension_semantics<parallel>], iteration_bounds = array<i64: 1>, scalar_prefetch = 0 : i64, scratch_operands = 0 : i64, tpu.core_type = #tpu.core_type<tc>, window_params = [{transform_indices = @transform_0, window_bounds = array<i64: 1>}, {transform_indices = @transform_1, window_bounds = array<i64: 8, 1024>}, {transform_indices = @transform_2, window_bounds = array<i64: 8, 1024>}]} {
    %c0 = arith.constant 0 : index
    %0 = memref.load %arg1[%c0] : memref<1xf32, #tpu.memory_space<smem>>
    %cst = arith.constant 1.000000e+00 : f32
    %1 = arith.divf %cst, %0 : f32
    %cst_0 = arith.constant 1.500000e+01 : f32
    %2 = arith.mulf %cst_0, %1 : f32
    %cst_1 = arith.constant 0.0666666701 : f32
    %3 = arith.mulf %0, %cst_1 : f32
    %c0_2 = arith.constant 0 : index
    %c0_3 = arith.constant 0 : index
    %4 = vector.load %arg2[%c0_2, %c0_3] : memref<8x1024xf32, #tpu.memory_space<vmem>>, vector<8x1024xf32>
    %cst_4 = arith.constant 0.000000e+00 : f32
    %5 = vector.broadcast %cst_4 : f32 to vector<8x1024xf32>
    %6 = arith.maximumf %5, %4 : vector<8x1024xf32>
    %7 = vector.broadcast %0 : f32 to vector<8x1024xf32>
    %8 = arith.minimumf %7, %6 : vector<8x1024xf32>
    %9 = vector.broadcast %2 : f32 to vector<8x1024xf32>
    %10 = arith.mulf %8, %9 : vector<8x1024xf32>
    %11 = math.roundeven %10 : vector<8x1024xf32>
    %12 = vector.broadcast %3 : f32 to vector<8x1024xf32>
    %13 = arith.mulf %11, %12 : vector<8x1024xf32>
    %c0_5 = arith.constant 0 : index
    %c0_6 = arith.constant 0 : index
    %14 = vector.load %arg3[%c0_5, %c0_6] : memref<8x1024xf32, #tpu.memory_space<vmem>>, vector<8x1024xf32>
    tpu.vector_store %arg3[%c0_5, %c0_6], %13 {strides = array<i32>} : memref<8x1024xf32, #tpu.memory_space<vmem>>, vector<8x1024xf32>,
    return
  }
  func.func @transform_0(%arg0: i32) -> i32 {
    %c0_i32 = arith.constant 0 : i32
    %c0_i32_0 = arith.constant 0 : i32
    return %c0_i32 : i32
  }
  func.func @transform_1(%arg0: i32) -> (i32, i32) {
    %c0_i32 = arith.constant 0 : i32
    %c0_i32_0 = arith.constant 0 : i32
    return %arg0, %c0_i32 : i32, i32
  }
  func.func @transform_2(%arg0: i32) -> (i32, i32) {
    %c0_i32 = arith.constant 0 : i32
    %c0_i32_0 = arith.constant 0 : i32
    return %arg0, %c0_i32 : i32, i32
  }
}

</mosaic_0001>

<llo_original>
// kernel: tpu_custom_call.1
$region0: #{tpu_custom_call.1}
  #allocation0 [shape = 'u32[]', space=smem, size = 0x4, offset = 0x4, fixed_abs, tag = 'smem constant byte address 0x4 - core index']
  #allocation1 [shape = 'u32[144,128]{1,0:T(1,128)}', space=vmem, size = 0x12000, scoped, tag = 'internal scratch']
  #allocation2 [shape = 'f32[1]{0:T(128)S(6)}', space=smem, size = 0x200, scoped, tag = 'scoped memory for tpu_custom_call.1']
  %s0 = inlined_call_operand.<no memory space> [shape: f32[1], index: 0, kind: input, shape index: {}]
  %s1 = inlined_call_operand.hbm [shape: f32[8,1024], index: 1, kind: input, shape index: {}]
  %s2 = inlined_call_operand.hbm [shape: f32[8,1024], index: 2, kind: output, shape index: {}]
  %s3 = sld [smem:[#allocation0]]
  $region22: #{tpu_custom_call.1} parent=0
    _
  %s5 = ssub.s32 1, %s3
  %s6 = scalar_select 0, %s5, %s3
  %7 = sst [smem:[#allocation2]] %s0
  $region1: #{tpu_custom_call.1} parent=0
    #allocation3 [shape = 'u8[32768]{0}', space=vmem, size = 0x8000, scoped, tag = 'input window, operand 1, single buffered']
    #allocation4 [shape = 's32[1]{0}', space=sflag, size = 0x4, scoped, tag = 'scoped memory for tpu_custom_call.1']
    #allocation5 [shape = 's32[1]{0}', space=sflag, size = 0x4, scoped, tag = 'scoped memory for tpu_custom_call.1']
    #allocation6 [shape = 'u8[32768]{0}', space=vmem, size = 0x8000, scoped, tag = 'output window, operand 0, single buffered']
    %8 = vsyncpa [#allocation4], 0
    %9 = vsyncpa [#allocation5], 0
    // Predicated region
    $region2: #{tpu_custom_call.1} parent=1 // pred_check
      _
    $region3: #{tpu_custom_call.1} parent=1 // pred_check_branch
      %11 = sbr.rel (0) target = $region5
    $region4: #{tpu_custom_call.1} parent=1 // pred_region
      _
    $region5: #{tpu_custom_call.1} parent=1 // pred_fallthru
      _
    // Predicated region
    $region6: #{tpu_custom_call.1} parent=1 // pred_check
      _
    $region7: #{tpu_custom_call.1} parent=1 // pred_check_branch
      %13 = sbr.rel (0) target = $region9
    $region8: #{tpu_custom_call.1} parent=1 // pred_region
      %s15 = ssub.s32 1024, 1024
      %16 = vsyncadd [#allocation4], %s15
      %s18 = sshll.u32 [#allocation3], 4
      %s19 = int_to_ptr.vmem [resolvable:$true] %s18
      %21 = dma.hbm_to_vmem [thread:$0]  %s1, 1024, %s19, [#allocation4]
    $region9: #{tpu_custom_call.1} parent=1 // pred_fallthru
      _
    // Predicated region
    $region10: #{tpu_custom_call.1} parent=1 // pred_check
      _
    $region11: #{tpu_custom_call.1} parent=1 // pred_check_branch
      %23 = sbr.rel (0) target = $region13
    $region12: #{tpu_custom_call.1} parent=1 // pred_region
      %24 = dma.done [#allocation4], 1024
    $region13: #{tpu_custom_call.1} parent=1 // pred_fallthru
      _
    %s25 = sld [smem:[#allocation2]]
    %v26 = vstv %s25
    %v27 = vrcp.pop %v26
    %s28 = vtos %v27
    %s29 = smul.f32 %s28, 15.0
    %s30 = smul.f32 %s25, 0.06666667
    %v31 = vld [vmem:[#allocation3] sm:$0xff]
    %v32 = vld [vmem:[#allocation3 + $0x8] sm:$0xff]
    %v33 = vld [vmem:[#allocation3 + $0x10] sm:$0xff]
    %v34 = vld [vmem:[#allocation3 + $0x18] sm:$0xff]
    %v35 = vld [vmem:[#allocation3 + $0x20] sm:$0xff]
    %v36 = vld [vmem:[#allocation3 + $0x28] sm:$0xff]
    %v37 = vld [vmem:[#allocation3 + $0x30] sm:$0xff]
    %v38 = vld [vmem:[#allocation3 + $0x38] sm:$0xff]
    %v39 = vmax.f32 %v31, 0.0
    %v40 = vmax.f32 %v32, 0.0
    %v41 = vmax.f32 %v33, 0.0
    %v42 = vmax.f32 %v34, 0.0
    %v43 = vmax.f32 %v35, 0.0
    %v44 = vmax.f32 %v36, 0.0
    %v45 = vmax.f32 %v37, 0.0
    %v46 = vmax.f32 %v38, 0.0
    %v47 = vstv %s25
    %v48 = vmin.f32 %v47, %v39
    %v49 = vmin.f32 %v47, %v40
    %v50 = vmin.f32 %v47, %v41
    %v51 = vmin.f32 %v47, %v42
    %v52 = vmin.f32 %v47, %v43
    %v53 = vmin.f32 %v47, %v44
    %v54 = vmin.f32 %v47, %v45
    %v55 = vmin.f32 %v47, %v46
    %v56 = vstv %s29
    %v57 = vmul.f32 %v48, %v56
    %v58 = vmul.f32 %v49, %v56
    %v59 = vmul.f32 %v50, %v56
    %v60 = vmul.f32 %v51, %v56
    %v61 = vmul.f32 %v52, %v56
    %v62 = vmul.f32 %v53, %v56
    %v63 = vmul.f32 %v54, %v56
    %v64 = vmul.f32 %v55, %v56
    %v65 = vround.ne.pseudo %v57
    %v66 = vround.ne.pseudo %v58
    %v67 = vround.ne.pseudo %v59
    %v68 = vround.ne.pseudo %v60
    %v69 = vround.ne.pseudo %v61
    %v70 = vround.ne.pseudo %v62
    %v71 = vround.ne.pseudo %v63
    %v72 = vround.ne.pseudo %v64
    %v73 = vstv %s30
    %v74 = vmul.f32 %v65, %v73
    %v75 = vmul.f32 %v66, %v73
    %v76 = vmul.f32 %v67, %v73
    %v77 = vmul.f32 %v68, %v73
    %v78 = vmul.f32 %v69, %v73
    %v79 = vmul.f32 %v70, %v73
    %v80 = vmul.f32 %v71, %v73
    %v81 = vmul.f32 %v72, %v73
    %82 = vst [vmem:[#allocation6] sm:$0xff] %v74
    %83 = vst [vmem:[#allocation6 + $0x8] sm:$0xff] %v75
    %84 = vst [vmem:[#allocation6 + $0x10] sm:$0xff] %v76
    %85 = vst [vmem:[#allocation6 + $0x18] sm:$0xff] %v77
    %86 = vst [vmem:[#allocation6 + $0x20] sm:$0xff] %v78
    %87 = vst [vmem:[#allocation6 + $0x28] sm:$0xff] %v79
    %88 = vst [vmem:[#allocation6 + $0x30] sm:$0xff] %v80
    %89 = vst [vmem:[#allocation6 + $0x38] sm:$0xff] %v81
    // Predicated region
    $region14: #{tpu_custom_call.1} parent=1 // pred_check
      _
    $region15: #{tpu_custom_call.1} parent=1 // pred_check_branch
      %91 = sbr.rel (0) target = $region17
    $region16: #{tpu_custom_call.1} parent=1 // pred_region
      %s93 = ssub.s32 1024, 1024
      %94 = vsyncadd [#allocation5], %s93
      %s96 = sshll.u32 [#allocation6], 4
      %s97 = int_to_ptr.vmem [resolvable:$true] %s96
      %99 = dma.vmem_to_hbm [thread:$0]  %s97, 1024, %s2, [#allocation5]
    $region17: #{tpu_custom_call.1} parent=1 // pred_fallthru
      _
    // Predicated region
    $region18: #{tpu_custom_call.1} parent=1 // pred_check
      _
    $region19: #{tpu_custom_call.1} parent=1 // pred_check_branch
      %101 = sbr.rel (0) target = $region21
    $region20: #{tpu_custom_call.1} parent=1 // pred_region
      %102 = dma.done [#allocation5], 1024
    $region21: #{tpu_custom_call.1} parent=1 // pred_fallthru
      _
    %103 = vsyncpa [#allocation4], 1
    %104 = vsyncpa [#allocation5], 1

</llo_original>
